<compile_context>
chip_gen: v7x
topology: tpu7x:2x2x1
jax: 0.10.0
libtpu: 0.0.40
codegen_flags: <defaults>
</compile_context>

<pallas_src>
import math

import jax
import jax.numpy as jnp
from jax.experimental import pallas as pl
from jax.experimental.pallas import tpu as pltpu


# ---------------------------------------------------------------------------
# Buffer init (identical to the PyTorch __init__).
# ---------------------------------------------------------------------------
def make_positional_encoding(d_model: int, max_seq_length: int,
                             dtype=jnp.float32) -> jnp.ndarray:
    position = jnp.arange(0, max_seq_length, dtype=jnp.float32)[:, None]       # (L, 1)
    div_term = jnp.exp(
        jnp.arange(0, d_model, 2, dtype=jnp.float32) * -(math.log(10000.0) / d_model)
    )                                                                           # (D/2,)
    pe = jnp.zeros((max_seq_length, d_model), dtype=jnp.float32)
    pe = pe.at[:, 0::2].set(jnp.sin(position * div_term))
    pe = pe.at[:, 1::2].set(jnp.cos(position * div_term))
    # Build in the activation dtype at init so the forward path never re-casts.
    return pe.astype(dtype)                                                     # (L, D)


# ---------------------------------------------------------------------------
# Kernel body (shared by both layouts).
#   Path A: x_ref/o_ref (1, ts, D), pe_ref (ts, D)   -> broadcast over batch dim.
#   Path B: x_ref/o_ref (bt, tc),   pe_ref (1, tc)   -> sublane broadcast.
# ---------------------------------------------------------------------------
def _add_pe_kernel(x_ref, pe_ref, o_ref):
    o_ref[...] = x_ref[...] + pe_ref[...]


# ---------------------------------------------------------------------------
# Tile-size helpers (cdiv-friendly: tiles need not divide the array dims).
# ---------------------------------------------------------------------------
_SUBLANE_MULTIPLE = {4: 8, 2: 16, 1: 32}  # itemsize -> required sublane multiple


def _pick_row_tile(n_rows: int, bytes_per_row: int, sublane: int, budget: int) -> int:
    """Sublane-aligned row tile within `budget` bytes, or the full dim."""
    t = (budget // max(1, bytes_per_row)) // sublane * sublane
    t = max(sublane, t)
    return n_rows if t >= n_rows else t


def _pick_col_tile(n_cols: int, itemsize: int, rows: int, budget: int) -> int:
    """128-lane-aligned column tile within `budget` bytes, or the full dim."""
    t = (budget // max(1, rows * itemsize)) // 128 * 128
    t = max(128, t)
    return n_cols if t >= n_cols else t


# ---------------------------------------------------------------------------
# Forward wrapper.
# ---------------------------------------------------------------------------
def positional_encoding_forward(
    x: jnp.ndarray,
    pe: jnp.ndarray,
    *,
    target_block_bytes: int = 4 * 1024 * 1024,
) -> jnp.ndarray:
    """x: (B, S, D); pe: (max_seq_length, D). Returns x + pe[None, :S, :]."""
    B, S, D = x.shape
    L = pe.shape[0]
    assert pe.shape[1] == D and S <= L, "pe buffer smaller than sequence"
    dtype = x.dtype
    itemsize = dtype.itemsize
    sublane = _SUBLANE_MULTIPLE.get(itemsize, 8)

    if pe.dtype != dtype:
        # Prefer building pe in the activation dtype at init (see make_positional_encoding).
        pe = pe.astype(dtype)

    compiler_params = pltpu.CompilerParams(
        dimension_semantics=("parallel", "parallel"),
        vmem_limit_bytes=48 * 1024 * 1024,   # safe on v5e/v6e (128 MiB) and v7x (64 MiB)
    )

    if D % 128 == 0 or (S * D) % 128 != 0:
        # ---- Path A: row tiling over a (row_blocks, B) grid --------------------
        # pe block index depends only on the outer row axis, so it is fetched
        # once per row block and reused across the whole batch (inner axis).
        # When D % 128 != 0 this is the unaligned fallback: the last block dim
        # equals the full array dim (legal); stores are masked but VMEM stays
        # bounded by the row tile.
        ts = _pick_row_tile(S, D * itemsize, sublane, target_block_bytes)
        n_r = pl.cdiv(S, ts)
        return pl.pallas_call(
            _add_pe_kernel,
            out_shape=jax.ShapeDtypeStruct((B, S, D), dtype),
            grid_spec=pltpu.PrefetchScalarGridSpec(
                num_scalar_prefetch=0,
                grid=(n_r, B),
                in_specs=[
                    pl.BlockSpec((1, ts, D), lambda r, b: (b, r, 0)),
                    pl.BlockSpec((ts, D), lambda r, b: (r, 0)),
                ],
                out_specs=pl.BlockSpec((1, ts, D), lambda r, b: (b, r, 0)),
            ),
            compiler_params=compiler_params,
        )(x, pe)   # full pe buffer; only the first ceil(S/ts) row blocks are DMA'd

    # ---- Path B: small / unaligned D with S*D lane-aligned ---------------------
    # Flatten the last two dims so stores stay lane-dense (multiple of 128);
    # pe is a (1, tc) row broadcast over batch sublanes.  Column axis is the
    # outer grid axis so the pe tile is reused across batch blocks.
    total = S * D
    bt = B if B <= 64 else 64                       # 64 is a multiple of every sublane req.
    tc = _pick_col_tile(total, itemsize, bt, target_block_bytes)
    n_c = pl.cdiv(total, tc)
    n_b = pl.cdiv(B, bt)

    x2 = x.reshape(B, total)
    pe2 = pe[:S, :].reshape(1, total)
    out2 = pl.pallas_call(
        _add_pe_kernel,
        out_shape=jax.ShapeDtypeStruct((B, total), dtype),
        grid_spec=pltpu.PrefetchScalarGridSpec(
            num_scalar_prefetch=0,
            grid=(n_c, n_b),
            in_specs=[
                pl.BlockSpec((bt, tc), lambda c, b: (b, c)),
                pl.BlockSpec((1, tc), lambda c, b: (0, c)),
            ],
            out_specs=pl.BlockSpec((bt, tc), lambda c, b: (b, c)),
        ),
        compiler_params=compiler_params,
    )(x2, pe2)
    return out2.reshape(B, S, D)


# ---------------------------------------------------------------------------
# Self-test.
# ---------------------------------------------------------------------------
if __name__ == "__main__":
    key = jax.random.PRNGKey(0)

    # (B, S, D, max_seq_len, dtype, target_block_bytes)
    tests = [
        (2, 8, 32, 16, jnp.float32, 4 << 20),     # Path B: D unaligned, S*D % 128 == 0
        (2, 64, 32, 64, jnp.float32, 2048),       # Path B with multiple column blocks
        (2, 32, 128, 64, jnp.float32, 8192),      # Path A: multi row blocks, pe reuse over batch
        (3, 20, 128, 64, jnp.float32, 8192),      # Path A: non-dividing S -> masked edge block
        (2, 16, 128, 32, jnp.bfloat16, 4 << 20),  # Path A: bf16 (sublane=16)
        (2, 5, 24, 8, jnp.float32, 4 << 20),      # Path A fallback: fully unaligned D
    ]

    for i, (B, S, D, L, dt, tb) in enumerate(tests):
        key, sub = jax.random.split(key)
        x = jax.random.normal(sub, (B, S, D), dtype=jnp.float32).astype(dt)
        pe = make_positional_encoding(D, L, dtype=dt)

        out = jax.block_until_ready(
            positional_encoding_forward(x, pe, target_block_bytes=tb)
        )

        ref = x + pe[None, :S, :]
        assert out.shape == (B, S, D), f"test {i}: bad shape {out.shape}"
        tol = 1e-6 if dt == jnp.float32 else 2e-2
        assert jnp.allclose(
            out.astype(jnp.float32), ref.astype(jnp.float32), atol=tol, rtol=tol
        ), f"test {i}: numerical mismatch"

    print("KERNEL_OK")
</pallas_src>

<mosaic_0001>
module attributes {stable_mosaic.version = 11 : i64} {
  func.func @_add_pe_kernel(%arg0: i32, %arg1: i32, %arg2: memref<2x256xf32, #tpu.memory_space<vmem>>, %arg3: memref<1x256xf32, #tpu.memory_space<vmem>>, %arg4: memref<2x256xf32, #tpu.memory_space<vmem>>) attributes {dimension_semantics = [#tpu.dimension_semantics<parallel>, #tpu.dimension_semantics<parallel>], iteration_bounds = array<i64: 1, 1>, scalar_prefetch = 0 : i64, scratch_operands = 0 : i64, tpu.core_type = #tpu.core_type<tc>, window_params = [{transform_indices = @transform_0, window_bounds = array<i64: 2, 256>}, {transform_indices = @transform_1, window_bounds = array<i64: 1, 256>}, {transform_indices = @transform_2, window_bounds = array<i64: 2, 256>}]} {
    %c0 = arith.constant 0 : index
    %c0_0 = arith.constant 0 : index
    %0 = vector.load %arg2[%c0, %c0_0] : memref<2x256xf32, #tpu.memory_space<vmem>>, vector<2x256xf32>
    %c0_1 = arith.constant 0 : index
    %c0_2 = arith.constant 0 : index
    %1 = vector.load %arg3[%c0_1, %c0_2] : memref<1x256xf32, #tpu.memory_space<vmem>>, vector<1x256xf32>
    %2 = vector.broadcast %1 : vector<1x256xf32> to vector<2x256xf32>
    %3 = arith.addf %0, %2 : vector<2x256xf32>
    %c0_3 = arith.constant 0 : index
    %c0_4 = arith.constant 0 : index
    %4 = vector.load %arg4[%c0_3, %c0_4] : memref<2x256xf32, #tpu.memory_space<vmem>>, vector<2x256xf32>
    tpu.vector_store %arg4[%c0_3, %c0_4], %3 {strides = array<i32>} : memref<2x256xf32, #tpu.memory_space<vmem>>, vector<2x256xf32>,
    return
  }
  func.func @transform_0(%arg0: i32, %arg1: i32) -> (i32, i32) {
    %c0_i32 = arith.constant 0 : i32
    return %arg1, %arg0 : i32, i32
  }
  func.func @transform_1(%arg0: i32, %arg1: i32) -> (i32, i32) {
    %c0_i32 = arith.constant 0 : i32
    %c0_i32_0 = arith.constant 0 : i32
    return %c0_i32, %arg0 : i32, i32
  }
  func.func @transform_2(%arg0: i32, %arg1: i32) -> (i32, i32) {
    %c0_i32 = arith.constant 0 : i32
    return %arg1, %arg0 : i32, i32
  }
}

</mosaic_0001>

<llo_original>
// kernel: tpu_custom_call.1
$region0: #{tpu_custom_call.1}
  #allocation0 [shape = 'u32[]', space=smem, size = 0x4, offset = 0x4, fixed_abs, tag = 'smem constant byte address 0x4 - core index']
  #allocation1 [shape = 'u32[144,128]{1,0:T(1,128)}', space=vmem, size = 0x12000, scoped, tag = 'internal scratch']
  %s0 = inlined_call_operand.hbm [shape: f32[2,256], index: 0, kind: input, shape index: {}]
  %s1 = inlined_call_operand.vmem [shape: f32[1,256], index: 1, kind: input, shape index: {}]
  %s2 = inlined_call_operand.hbm [shape: f32[2,256], index: 2, kind: output, shape index: {}]
  %s3 = sld [smem:[#allocation0]]
  $region22: #{tpu_custom_call.1} parent=0
    _
  %s5 = ssub.s32 1, %s3
  %s6 = scalar_select 0, %s5, %s3
  $region1: #{tpu_custom_call.1} parent=0
    #allocation2 [shape = 'u8[2048]{0}', space=vmem, size = 0x800, scoped, tag = 'input window, operand 0, single buffered']
    #allocation3 [shape = 's32[1]{0}', space=sflag, size = 0x4, scoped, tag = 'scoped memory for tpu_custom_call.1']
    #allocation4 [shape = 's32[1]{0}', space=sflag, size = 0x4, scoped, tag = 'scoped memory for tpu_custom_call.1']
    #allocation5 [shape = 'u8[2048]{0}', space=vmem, size = 0x800, scoped, tag = 'output window, operand 0, single buffered']
    %7 = vsyncpa [#allocation3], 0
    %8 = vsyncpa [#allocation4], 0
    // Predicated region
    $region2: #{tpu_custom_call.1} parent=1 // pred_check
      _
    $region3: #{tpu_custom_call.1} parent=1 // pred_check_branch
      %10 = sbr.rel (0) target = $region5
    $region4: #{tpu_custom_call.1} parent=1 // pred_region
      %s12 = ssub.s32 64, 64
      %13 = vsyncadd [#allocation3], %s12
      %s15 = sshll.u32 [#allocation2], 4
      %s16 = int_to_ptr.vmem [resolvable:$true] %s15
      %18 = dma.hbm_to_vmem [thread:$0]  %s0, 64, %s16, [#allocation3]
    $region5: #{tpu_custom_call.1} parent=1 // pred_fallthru
      _
    // Predicated region
    $region6: #{tpu_custom_call.1} parent=1 // pred_check
      _
    $region7: #{tpu_custom_call.1} parent=1 // pred_check_branch
      %20 = sbr.rel (0) target = $region9
    $region8: #{tpu_custom_call.1} parent=1 // pred_region
      _
    $region9: #{tpu_custom_call.1} parent=1 // pred_fallthru
      _
    // Predicated region
    $region10: #{tpu_custom_call.1} parent=1 // pred_check
      _
    $region11: #{tpu_custom_call.1} parent=1 // pred_check_branch
      %22 = sbr.rel (0) target = $region13
    $region12: #{tpu_custom_call.1} parent=1 // pred_region
      %23 = dma.done [#allocation3], 64
    $region13: #{tpu_custom_call.1} parent=1 // pred_fallthru
      _
    %v24 = vld [vmem:[#allocation2] sm:$0xf]
    %v25 = vld [vmem:[%s1] sm:$0x3]
    %v27 = vlaneseq
    %v28 = vshrl.u32 %v27, 7
    %v29 = vsub.s32 0, %v28
    %v30 = vrot.slane %v25, %v29
    %v31 = vlaneseq
    %v32 = vshrl.u32 %v31, 7
    %v33 = vsub.s32 1, %v32
    %v34 = vrot.slane %v25, %v33
    %v35 = vcombine.low %v30, %v34
    %v37 = vunpack.c.l.s4 1983009808
    %v38 = vunpack.c.0.s8 %v37
    %v39 = vlaneseq
    %v40 = vshrl.u32 %v39, 7
    %v41 = vsub.s32 %v38, %v40
    %v42 = vrot.slane %v35, %v41
    %v44 = vadd.f32 %v24, %v42
    %45 = vst [vmem:[#allocation5] sm:$0xf] %v44
    // Predicated region
    $region14: #{tpu_custom_call.1} parent=1 // pred_check
      _
    $region15: #{tpu_custom_call.1} parent=1 // pred_check_branch
      %47 = sbr.rel (0) target = $region17
    $region16: #{tpu_custom_call.1} parent=1 // pred_region
      %s49 = ssub.s32 64, 64
      %50 = vsyncadd [#allocation4], %s49
      %s52 = sshll.u32 [#allocation5], 4
      %s53 = int_to_ptr.vmem [resolvable:$true] %s52
      %55 = dma.vmem_to_hbm [thread:$0]  %s53, 64, %s2, [#allocation4]
    $region17: #{tpu_custom_call.1} parent=1 // pred_fallthru
      _
    // Predicated region
    $region18: #{tpu_custom_call.1} parent=1 // pred_check
      _
    $region19: #{tpu_custom_call.1} parent=1 // pred_check_branch
      %57 = sbr.rel (0) target = $region21
    $region20: #{tpu_custom_call.1} parent=1 // pred_region
      %58 = dma.done [#allocation4], 64
    $region21: #{tpu_custom_call.1} parent=1 // pred_fallthru
      _
    %59 = vsyncpa [#allocation3], 1
    %60 = vsyncpa [#allocation4], 1

</llo_original>
